<compile_context>
chip_gen: v6e
topology: v6e:2x2x1
jax: 0.10.0
libtpu: 0.0.40
codegen_flags: <defaults>
</compile_context>

<pallas_src>
import numpy as np
import jax
import jax.numpy as jnp
from jax.experimental import pallas as pl
from jax.experimental.pallas import tpu as pltpu


def _transition_kernel(x_ref, w_ref, shift_ref, pool_ref, out_ref):
    # x_ref:     (1, C_in, HW)   lane-dense activation block for this batch
    # w_ref:     (C_out, C_in)   1x1 conv weight with BN scale pre-folded
    # shift_ref: (C_out, 1)      per-channel BN shift
    # pool_ref:  (HW, HW/4)      AvgPool2d(2,2) as a dense pooling matrix
    # out_ref:   (1, C_out, HW/4)
    x = x_ref[0]                                                    # (C_in, HW)

    # 1x1 conv (BN scale folded into w) -> MXU matmul.
    z = jnp.dot(w_ref[...], x, preferred_element_type=jnp.float32)  # (C_out, HW)

    # BN shift + ReLU on the VPU (shift broadcasts over the lane axis).
    z = jnp.maximum(z + shift_ref[...], 0.0)

    # AvgPool2d(2,2) as a matmul against the precomputed pooling matrix (MXU).
    out_ref[0] = jnp.dot(
        z, pool_ref[...], preferred_element_type=jnp.float32
    ).astype(out_ref.dtype)


@jax.jit
def transition_pallas(x, w_folded, shift, pool_mat):
    B, C_in, H, W = x.shape
    C_out = w_folded.shape[0]
    HW = H * W
    HW4 = (H // 2) * (W // 2)

    x_flat = x.reshape(B, C_in, HW)                     # lane-dense layout

    out_flat = pl.pallas_call(
        _transition_kernel,
        out_shape=jax.ShapeDtypeStruct((B, C_out, HW4), x.dtype),
        grid=(B,),
        in_specs=[
            pl.BlockSpec((1, C_in, HW), lambda b: (b, 0, 0)),
            pl.BlockSpec((C_out, C_in), lambda b: (0, 0)),
            pl.BlockSpec((C_out, 1), lambda b: (0, 0)),
            pl.BlockSpec((HW, HW4), lambda b: (0, 0)),
        ],
        out_specs=pl.BlockSpec((1, C_out, HW4), lambda b: (b, 0, 0)),
        compiler_params=pltpu.CompilerParams(
            dimension_semantics=("parallel",)),
    )(x_flat, w_folded, shift, pool_mat)

    return out_flat.reshape(B, C_out, H // 2, W // 2)


def make_pool_matrix(H, W):
    """Dense (H*W, (H/2)*(W/2)) matrix implementing AvgPool2d(2, 2)."""
    Ho, Wo = H // 2, W // 2
    P = np.zeros((H * W, Ho * Wo), np.float32)
    for h in range(H):
        for w in range(W):
            P[h * W + w, (h // 2) * Wo + (w // 2)] = 0.25
    return jnp.asarray(P)


def transition_reference(x, conv_w, gamma, beta, rmean, rvar, eps=1e-5):
    """Pure-JAX reference replicating the PyTorch forward (eval-mode BN)."""
    z = jnp.einsum("oi,bihw->bohw", conv_w, x)                      # 1x1 conv
    z = (z - rmean[None, :, None, None]) / jnp.sqrt(
        rvar[None, :, None, None] + eps)
    z = z * gamma[None, :, None, None] + beta[None, :, None, None]  # BN
    z = jnp.maximum(z, 0.0)                                         # ReLU
    B, C, H, W = z.shape
    return z.reshape(B, C, H // 2, 2, W // 2, 2).mean(axis=(3, 5))  # AvgPool2d


if __name__ == "__main__":
    B, C_in, C_out, H, W = 2, 32, 16, 16, 16

    key = jax.random.PRNGKey(0)
    kx, kw = jax.random.split(key, 2)

    x = jax.random.normal(kx, (B, C_in, H, W), jnp.float32)
    # Conv2d(C_in, C_out, kernel_size=1, bias=False) weight, (C_out, C_in).
    conv_w = jax.random.normal(kw, (C_out, C_in), jnp.float32) / np.sqrt(C_in)

    # Fresh BatchNorm2d(C_out) parameters / running stats (eval mode).
    gamma = jnp.ones((C_out,), jnp.float32)
    beta = jnp.zeros((C_out,), jnp.float32)
    rmean = jnp.zeros((C_out,), jnp.float32)
    rvar = jnp.ones((C_out,), jnp.float32)
    eps = 1e-5

    # Fold eval-mode BN into the conv weight (scale) and a per-channel shift.
    bn_scale = gamma / jnp.sqrt(rvar + eps)                  # (C_out,)
    w_folded = conv_w * bn_scale[:, None]                    # (C_out, C_in)
    shift = (beta - rmean * bn_scale)[:, None]               # (C_out, 1)

    pool_mat = make_pool_matrix(H, W)                        # (HW, HW/4)

    out = transition_pallas(x, w_folded, shift, pool_mat)
    out = jax.block_until_ready(out)

    ref = transition_reference(x, conv_w, gamma, beta, rmean, rvar, eps)
    np.testing.assert_allclose(np.asarray(out), np.asarray(ref),
                               rtol=1e-4, atol=1e-4)
    print("KERNEL_OK")
</pallas_src>

<mosaic_0001>
module attributes {stable_mosaic.version = 11 : i64} {
  func.func @_transition_kernel(%arg0: i32, %arg1: memref<1x32x256xf32, #tpu.memory_space<vmem>>, %arg2: memref<16x32xf32, #tpu.memory_space<vmem>>, %arg3: memref<16x1xf32, #tpu.memory_space<vmem>>, %arg4: memref<256x64xf32, #tpu.memory_space<vmem>>, %arg5: memref<1x16x64xf32, #tpu.memory_space<vmem>>) attributes {dimension_semantics = [#tpu.dimension_semantics<parallel>], iteration_bounds = array<i64: 2>, scalar_prefetch = 0 : i64, scratch_operands = 0 : i64, tpu.core_type = #tpu.core_type<tc>, window_params = [{transform_indices = @transform_0, window_bounds = array<i64: 1, 32, 256>}, {pipeline_mode = #tpu.pipeline_mode<synchronous>, transform_indices = @transform_1, window_bounds = array<i64: 16, 32>}, {pipeline_mode = #tpu.pipeline_mode<synchronous>, transform_indices = @transform_2, window_bounds = array<i64: 16, 1>}, {pipeline_mode = #tpu.pipeline_mode<synchronous>, transform_indices = @transform_3, window_bounds = array<i64: 256, 64>}, {transform_indices = @transform_4, window_bounds = array<i64: 1, 16, 64>}]} {
    %c0 = arith.constant 0 : index
    %c0_0 = arith.constant 0 : index
    %c0_1 = arith.constant 0 : index
    %0 = vector.load %arg1[%c0, %c0_0, %c0_1] : memref<1x32x256xf32, #tpu.memory_space<vmem>>, vector<1x32x256xf32>
    %1 = vector.shape_cast %0 : vector<1x32x256xf32> to vector<32x256xf32>
    %c0_2 = arith.constant 0 : index
    %c0_3 = arith.constant 0 : index
    %2 = vector.load %arg2[%c0_2, %c0_3] : memref<16x32xf32, #tpu.memory_space<vmem>>, vector<16x32xf32>
    %cst = arith.constant dense<0.000000e+00> : vector<16x256xf32>
    %3 = tpu.matmul %2, %1, %cst {dimension_numbers = #tpu.dot_dimension_numbers<[1], [0], [0], [1], [0, 0, 1, 1], [], []>} : vector<16x32xf32>, vector<32x256xf32>, vector<16x256xf32> -> vector<16x256xf32>
    %c0_4 = arith.constant 0 : index
    %c0_5 = arith.constant 0 : index
    %4 = vector.load %arg3[%c0_4, %c0_5] : memref<16x1xf32, #tpu.memory_space<vmem>>, vector<16x1xf32>
    %5 = vector.broadcast %4 : vector<16x1xf32> to vector<16x256xf32>
    %6 = arith.addf %3, %5 : vector<16x256xf32>
    %cst_6 = arith.constant 0.000000e+00 : f32
    %7 = vector.broadcast %cst_6 : f32 to vector<16x256xf32>
    %8 = arith.maximumf %6, %7 : vector<16x256xf32>
    %c0_7 = arith.constant 0 : index
    %c0_8 = arith.constant 0 : index
    %9 = vector.load %arg4[%c0_7, %c0_8] : memref<256x64xf32, #tpu.memory_space<vmem>>, vector<256x64xf32>
    %cst_9 = arith.constant dense<0.000000e+00> : vector<16x64xf32>
    %10 = tpu.matmul %8, %9, %cst_9 {dimension_numbers = #tpu.dot_dimension_numbers<[1], [0], [0], [1], [0, 0, 1, 1], [], []>} : vector<16x256xf32>, vector<256x64xf32>, vector<16x64xf32> -> vector<16x64xf32>
    %c0_10 = arith.constant 0 : index
    %c0_11 = arith.constant 0 : index
    %c0_12 = arith.constant 0 : index
    %11 = vector.load %arg5[%c0_10, %c0_11, %c0_12] : memref<1x16x64xf32, #tpu.memory_space<vmem>>, vector<1x16x64xf32>
    %12 = vector.shape_cast %11 : vector<1x16x64xf32> to vector<16x64xf32>
    %13 = vector.shape_cast %10 : vector<16x64xf32> to vector<1x16x64xf32>
    tpu.vector_store %arg5[%c0_10, %c0_11, %c0_12], %13 {strides = array<i32>} : memref<1x16x64xf32, #tpu.memory_space<vmem>>, vector<1x16x64xf32>,
    return
  }
  func.func @transform_0(%arg0: i32) -> (i32, i32, i32) {
    %c0_i32 = arith.constant 0 : i32
    %c0_i32_0 = arith.constant 0 : i32
    %c0_i32_1 = arith.constant 0 : i32
    return %arg0, %c0_i32, %c0_i32_0 : i32, i32, i32
  }
  func.func @transform_1(%arg0: i32) -> (i32, i32) {
    %c0_i32 = arith.constant 0 : i32
    %c0_i32_0 = arith.constant 0 : i32
    %c0_i32_1 = arith.constant 0 : i32
    return %c0_i32, %c0_i32_0 : i32, i32
  }
  func.func @transform_2(%arg0: i32) -> (i32, i32) {
    %c0_i32 = arith.constant 0 : i32
    %c0_i32_0 = arith.constant 0 : i32
    %c0_i32_1 = arith.constant 0 : i32
    return %c0_i32, %c0_i32_0 : i32, i32
  }
  func.func @transform_3(%arg0: i32) -> (i32, i32) {
    %c0_i32 = arith.constant 0 : i32
    %c0_i32_0 = arith.constant 0 : i32
    %c0_i32_1 = arith.constant 0 : i32
    return %c0_i32, %c0_i32_0 : i32, i32
  }
  func.func @transform_4(%arg0: i32) -> (i32, i32, i32) {
    %c0_i32 = arith.constant 0 : i32
    %c0_i32_0 = arith.constant 0 : i32
    %c0_i32_1 = arith.constant 0 : i32
    return %arg0, %c0_i32, %c0_i32_0 : i32, i32, i32
  }
}

</mosaic_0001>

<llo_original>
// kernel: transition_pallas.1
$region0: #{transition_pallas.1}
  #allocation0 [shape = 'u32[]', space=smem, size = 0x4, offset = 0x4, fixed_abs, tag = 'smem constant byte address 0x4 - core index']
  #allocation1 [shape = 'u32[144,128]{1,0:T(1,128)}', space=vmem, size = 0x12000, scoped, tag = 'internal scratch']
  %s0 = inlined_call_operand.vmem [shape: f32[2,32,256], index: 0, kind: input, shape index: {}]
  %s1 = inlined_call_operand.vmem [shape: f32[16,32], index: 1, kind: input, shape index: {}]
  %s2 = inlined_call_operand.vmem [shape: f32[16,1], index: 2, kind: input, shape index: {}]
  %s3 = inlined_call_operand.vmem [shape: f32[256,64], index: 3, kind: input, shape index: {}]
  %s4 = inlined_call_operand.vmem [shape: f32[2,16,64], index: 4, kind: output, shape index: {}]
  %s5 = sld [smem:[#allocation0]]
  $region49: #{transition_pallas.1} parent=0
    _
  %s7 = ssub.s32 1, %s5
  %s8 = scalar_select 0, %s7, %s5
  loop: start=0, step=1, limit=4
  $region2: #{transition_pallas.1} parent=0 // loop_pre_header
    _
  $region3: #{transition_pallas.1} parent=0 // loop_header
    %s10 = sphi 0, %s14
    %p11 = scmp.ge.s32.totalorder %s10, 4
    %s20 = sphi 0, %s22
    %s23 = sphi 0, %s20
    %s24 = sphi 0, %s23
    %s40 = sphi 0, %s24
    %s44 = sphi 0, %s44
    %s46 = sphi 0, %s44
    %s47 = sphi 0, %s46
    %s61 = sphi 0, %s47
    %s65 = sphi 0, %s65
    %s67 = sphi 0, %s65
    %s68 = sphi 0, %s67
    %s82 = sphi 0, %s68
    %s86 = sphi 0, %s86
    %s88 = sphi 0, %s86
    %s89 = sphi 0, %s88
    %s103 = sphi 0, %s89
    %s109 = sphi 0, %s111
    %s112 = sphi 0, %s109
    %s113 = sphi 0, %s112
    %s129 = sphi 0, %s113
  $region4: #{transition_pallas.1} parent=0 // loop_header_branch
    %13 = sbr.rel (%p11) target = $region8
  $region5: #{transition_pallas.1} parent=0 // loop_body
    %s15 = ssub.s32 %s10, 1
    %s16 = ssub.s32 %s10, 2
    %s17 = sadd.s32 %s10, 1
    %s18 = ssub.s32 %s10, %s17
    %p19 = scmp.eq.s32.totalorder %s18, 0
    %s21 = sadd.s32 %s20, 1
    %s22 = scalar_select %p19, %s20, %s21
    %p25 = pneg %p19
    %p26 = scmp.eq.s32.totalorder %s10, 1
    %p27 = por %p25, %p26
    %p28 = scmp.ne.s32.totalorder %s20, %s23
    %p29 = scmp.eq.s32.totalorder %s10, 0
    %p30 = por %p28, %p29
    %p31 = scmp.ne.s32.totalorder %s20, %s23
    %p32 = scmp.eq.s32.totalorder %s15, 1
    %p33 = por %p31, %p32
    %p34 = scmp.ne.s32.totalorder %s23, %s24
    %p35 = scmp.eq.s32.totalorder %s15, 0
    %p36 = por %p34, %p35
    %p37 = scmp.ne.s32.totalorder %s23, %s24
    %p38 = scmp.eq.s32.totalorder %s16, 1
    %p39 = por %p37, %p38
    %p41 = scmp.ne.s32.totalorder %s24, %s40
    %p42 = scmp.eq.s32.totalorder %s16, 0
    %p43 = por %p41, %p42
    %s45 = sadd.s32 %s44, 1
    %p48 = scmp.eq.s32.totalorder %s10, 1
    %p49 = scmp.ne.s32.totalorder %s44, %s46
    %p50 = scmp.eq.s32.totalorder %s10, 0
    %p51 = por %p49, %p50
    %p52 = scmp.ne.s32.totalorder %s44, %s46
    %p53 = scmp.eq.s32.totalorder %s15, 1
    %p54 = por %p52, %p53
    %p55 = scmp.ne.s32.totalorder %s46, %s47
    %p56 = scmp.eq.s32.totalorder %s15, 0
    %p57 = por %p55, %p56
    %p58 = scmp.ne.s32.totalorder %s46, %s47
    %p59 = scmp.eq.s32.totalorder %s16, 1
    %p60 = por %p58, %p59
    %p62 = scmp.ne.s32.totalorder %s47, %s61
    %p63 = scmp.eq.s32.totalorder %s16, 0
    %p64 = por %p62, %p63
    %s66 = sadd.s32 %s65, 1
    %p69 = scmp.eq.s32.totalorder %s10, 1
    %p70 = scmp.ne.s32.totalorder %s65, %s67
    %p71 = scmp.eq.s32.totalorder %s10, 0
    %p72 = por %p70, %p71
    %p73 = scmp.ne.s32.totalorder %s65, %s67
    %p74 = scmp.eq.s32.totalorder %s15, 1
    %p75 = por %p73, %p74
    %p76 = scmp.ne.s32.totalorder %s67, %s68
    %p77 = scmp.eq.s32.totalorder %s15, 0
    %p78 = por %p76, %p77
    %p79 = scmp.ne.s32.totalorder %s67, %s68
    %p80 = scmp.eq.s32.totalorder %s16, 1
    %p81 = por %p79, %p80
    %p83 = scmp.ne.s32.totalorder %s68, %s82
    %p84 = scmp.eq.s32.totalorder %s16, 0
    %p85 = por %p83, %p84
    %s87 = sadd.s32 %s86, 1
    %p90 = scmp.eq.s32.totalorder %s10, 1
    %p91 = scmp.ne.s32.totalorder %s86, %s88
    %p92 = scmp.eq.s32.totalorder %s10, 0
    %p93 = por %p91, %p92
    %p94 = scmp.ne.s32.totalorder %s86, %s88
    %p95 = scmp.eq.s32.totalorder %s15, 1
    %p96 = por %p94, %p95
    %p97 = scmp.ne.s32.totalorder %s88, %s89
    %p98 = scmp.eq.s32.totalorder %s15, 0
    %p99 = por %p97, %p98
    %p100 = scmp.ne.s32.totalorder %s88, %s89
    %p101 = scmp.eq.s32.totalorder %s16, 1
    %p102 = por %p100, %p101
    %p104 = scmp.ne.s32.totalorder %s89, %s103
    %p105 = scmp.eq.s32.totalorder %s16, 0
    %p106 = por %p104, %p105
    %s107 = ssub.s32 %s10, %s17
    %p108 = scmp.eq.s32.totalorder %s107, 0
    %s110 = sadd.s32 %s109, 1
    %s111 = scalar_select %p108, %s109, %s110
    %p114 = pneg %p108
    %p115 = scmp.eq.s32.totalorder %s10, 1
    %p116 = por %p114, %p115
    %p117 = scmp.ne.s32.totalorder %s109, %s112
    %p118 = scmp.eq.s32.totalorder %s10, 0
    %p119 = por %p117, %p118
    %p120 = scmp.ne.s32.totalorder %s109, %s112
    %p121 = scmp.eq.s32.totalorder %s15, 1
    %p122 = por %p120, %p121
    %p123 = scmp.ne.s32.totalorder %s112, %s113
    %p124 = scmp.eq.s32.totalorder %s15, 0
    %p125 = por %p123, %p124
    %p126 = scmp.ne.s32.totalorder %s112, %s113
    %p127 = scmp.eq.s32.totalorder %s16, 1
    %p128 = por %p126, %p127
    %p130 = scmp.ne.s32.totalorder %s113, %s129
    %p131 = scmp.eq.s32.totalorder %s16, 0
    %p132 = por %p130, %p131
    %p133 = scmp.le.s32.totalorder 1, %s10
    %p134 = scmp.lt.s32.totalorder %s10, 3
    %p135 = pnand %p133, %p134
    %p136 = pneg %p135
    // Predicated region
    $region9: #{transition_pallas.1} parent=5 // pred_check
      _
    $region10: #{transition_pallas.1} parent=5 // pred_check_branch
      %138 = sbr.rel (%p135) target = $region12
    $region11: #{transition_pallas.1} parent=5 // pred_region
      %s139 = ssub.s32 %s10, 1
      // Predicated region
      $region13: #{transition_pallas.1} parent=11 // pred_check
        %p140 = pneg %p57
      $region14: #{transition_pallas.1} parent=11 // pred_check_branch
        %142 = sbr.rel (%p140) target = $region16
      $region15: #{transition_pallas.1} parent=11 // pred_region
        _
      $region16: #{transition_pallas.1} parent=11 // pred_fallthru
        _
      // Predicated region
      $region17: #{transition_pallas.1} parent=11 // pred_check
        %p143 = pneg %p78
      $region18: #{transition_pallas.1} parent=11 // pred_check_branch
        %145 = sbr.rel (%p143) target = $region20
      $region19: #{transition_pallas.1} parent=11 // pred_region
        _
      $region20: #{transition_pallas.1} parent=11 // pred_fallthru
        _
      // Predicated region
      $region21: #{transition_pallas.1} parent=11 // pred_check
        %p146 = pneg %p99
      $region22: #{transition_pallas.1} parent=11 // pred_check_branch
        %148 = sbr.rel (%p146) target = $region24
      $region23: #{transition_pallas.1} parent=11 // pred_region
        _
      $region24: #{transition_pallas.1} parent=11 // pred_fallthru
        _
    $region12: #{transition_pallas.1} parent=5 // pred_fallthru
      _
    %p149 = scmp.lt.s32.totalorder %s10, 2
    // Predicated region
    $region25: #{transition_pallas.1} parent=5 // pred_check
      %p150 = pneg %p149
    $region26: #{transition_pallas.1} parent=5 // pred_check_branch
      %152 = sbr.rel (%p150) target = $region28
    $region27: #{transition_pallas.1} parent=5 // pred_region
      // Predicated region
      $region29: #{transition_pallas.1} parent=27 // pred_check
        %p153 = pneg %p30
      $region30: #{transition_pallas.1} parent=27 // pred_check_branch
        %155 = sbr.rel (%p153) target = $region32
      $region31: #{transition_pallas.1} parent=27 // pred_region
        %p156 = scmp.lt.s32.totalorder %s10, 1
        %s157 = scalar_select %p156, %s10, 1
        %s158 = smul.addr %s157, 8
        %s159 = smul.addr %s158, 8
        %s160 = scalar_lea.vmem %s0, %s159
      $region32: #{transition_pallas.1} parent=27 // pred_fallthru
        _
    $region28: #{transition_pallas.1} parent=5 // pred_fallthru
      _
    %p161 = scmp.le.s32.totalorder 1, %s10
    %p162 = scmp.lt.s32.totalorder %s10, 3
    %p163 = pnand %p161, %p162
    %p164 = pneg %p163
    // Predicated region
    $region33: #{transition_pallas.1} parent=5 // pred_check
      _
    $region34: #{transition_pallas.1} parent=5 // pred_check_branch
      %166 = sbr.rel (%p163) target = $region36
    $region35: #{transition_pallas.1} parent=5 // pred_region
      %s167 = ssub.s32 %s10, 1
      %p168 = scmp.lt.s32.totalorder %s15, 1
      %s169 = scalar_select %p168, %s15, 1
      %s170 = smul.addr %s169, 8
      %s171 = smul.addr %s170, 8
      %s172 = scalar_lea.vmem %s0, %s171
      %p173 = pneg %p36
      %p174 = pneg %p33
      %p175 = pneg %p57
      %p176 = pneg %p54
      %p177 = pneg %p78
      %p178 = pneg %p75
      %p179 = pneg %p99
      %p180 = pneg %p96
      %p181 = pneg %p125
      %p182 = pneg %p122
      %p183 = scmp.lt.s32.totalorder %s15, 1
      %s184 = scalar_select %p183, %s15, 1
      %s185 = smul.addr %s184, 2
      %s186 = smul.addr %s185, 8
      %s187 = scalar_lea.vmem %s4, %s186
      %p188 = scmp.lt.s32.totalorder %s15, 1
      %s189 = scalar_select %p188, %s15, 1
      %s190 = smul.addr %s189, 8
      %s191 = smul.addr %s190, 8
      %s192 = scalar_lea.vmem %s0, %s191
      %p193 = scmp.lt.s32.totalorder %s15, 1
      %s194 = scalar_select %p193, %s15, 1
      %s195 = smul.addr %s194, 2
      %s196 = smul.addr %s195, 8
      %s197 = scalar_lea.vmem %s4, %s196
      %v198 = vld [vmem:[%s192] sm:$0xff]
      %v199 = vld [vmem:[%s192 + $0x8] sm:$0xff]
      %v200 = vld [vmem:[%s192 + $0x10] sm:$0xff]
      %v201 = vld [vmem:[%s192 + $0x18] sm:$0xff]
      %v202 = vld [vmem:[%s192 + $0x20] sm:$0xff]
      %v203 = vld [vmem:[%s192 + $0x28] sm:$0xff]
      %v204 = vld [vmem:[%s192 + $0x30] sm:$0xff]
      %v205 = vld [vmem:[%s192 + $0x38] sm:$0xff]
      %v206 = vld [vmem:[%s1] sm:$0xff]
      %v207 = vld [vmem:[%s1 + $0x8] sm:$0xff]
      %v208 = vld [vmem:[%s2] sm:$0xff]
      %v209 = vld [vmem:[%s2 + $0x8] sm:$0xff]
      %211 = vset.pattern.permute.xlu0 0
      %212 = vperm.xlu0 %211, %v208
      %v213 = vpop.permute.xlu0 %212
      %216 = vset.pattern.permute.xlu0 0
      %217 = vperm.xlu0 %216, %v209
      %v218 = vpop.permute.xlu0 %217
      %vm220 = vcmask 261120
      %v222 = vsel %vm220, %v206, 0
      %v225 = vsel %vm220, %v207, 0
      %227 = vmatprep.subr.mxu0 0.0
      %228 = vmatpush1.msra.mxu0 0.0
      %229 = vmatprep.subr.mxu0 0.0
      %230 = vmatpush1.msra.mxu0 0.0
      %231 = vmatprep.subr.mxu0 0.0
      %232 = vmatpush1.msra.mxu0 0.0
      %233 = vmatprep.subr.mxu0 0.0
      %234 = vmatpush1.msra.mxu0 0.0
      %235 = vmatprep.subr.mxu0 0.0
      %236 = vmatpush1.msra.mxu0 0.0
      %237 = vmatprep.subr.mxu0 0.0
      %238 = vmatpush1.msra.mxu0 0.0
      %239 = vmatprep.subr.mxu0 0.0
      %240 = vmatpush1.msra.mxu0 0.0
      %241 = vmatprep.subr.mxu0 0.0
      %242 = vmatpush1.msra.mxu0 0.0
      %243 = vmatprep.subr.mxu0 0.0
      %244 = vmatpush1.msra.mxu0 0.0
      %245 = vmatprep.subr.mxu0 0.0
      %246 = vmatpush1.msra.mxu0 0.0
      %247 = vmatprep.subr.mxu0 0.0
      %248 = vmatpush1.msra.mxu0 0.0
      %249 = vmatprep.subr.mxu0 0.0
      %250 = vmatpush1.msra.mxu0 0.0
      %251 = vmatprep.subr.mxu0 %v205
      %252 = vmatpush1.msra.mxu0 %v204
      %253 = vmatprep.subr.mxu0 %v203
      %254 = vmatpush1.msra.mxu0 %v202
      %255 = vmatprep.subr.mxu0 %v201
      %256 = vmatpush1.msra.mxu0 %v200
      %257 = vmatprep.subr.mxu0 %v199
      %258 = vmatpush1.msra.mxu0 %v198
      %259 = vmatprep.subr.mxu0 0.0
      %260 = vmatpush2.msra.mxu0 0.0
      %261 = vmatprep.subr.mxu0 0.0
      %262 = vmatpush2.msra.mxu0 0.0
      %263 = vmatprep.subr.mxu0 0.0
      %264 = vmatpush2.msra.mxu0 0.0
      %265 = vmatprep.subr.mxu0 0.0
      %266 = vmatpush2.msra.mxu0 0.0
      %267 = vmatprep.subr.mxu0 0.0
      %268 = vmatpush2.msra.mxu0 0.0
      %269 = vmatprep.subr.mxu0 0.0
      %270 = vmatpush2.msra.mxu0 0.0
      %271 = vmatprep.subr.mxu0 0.0
      %272 = vmatpush2.msra.mxu0 0.0
      %273 = vmatprep.subr.mxu0 0.0
      %274 = vmatpush2.msra.mxu0 0.0
      %275 = vmatprep.subr.mxu0 0.0
      %276 = vmatpush2.msra.mxu0 0.0
      %277 = vmatprep.subr.mxu0 0.0
      %278 = vmatpush2.msra.mxu0 0.0
      %279 = vmatprep.subr.mxu0 0.0
      %280 = vmatpush2.msra.mxu0 0.0
      %281 = vmatprep.subr.mxu0 0.0
      %282 = vmatpush2.msra.mxu0 0.0
      %283 = vmatprep.subr.mxu0 0.0
      %284 = vmatpush2.msra.mxu0 0.0
      %285 = vmatprep.subr.mxu0 0.0
      %286 = vmatpush2.msra.mxu0 0.0
      %287 = vmatprep.subr.mxu0 0.0
      %288 = vmatpush2.msra.mxu0 0.0
      %289 = vmatprep.subr.mxu0 0.0
      %290 = vmatpush2.msra.mxu0 0.0
      %291 = vmatprep.mubr.f32.mxu0 0.0
      %292 = vmatmul.mubr.f32.gmra.mxu0 %v222
      %v293 = vpop.f32.mrf.mxu0
      %v294 = vadd.f32 %v213, %v293
      %v295 = vpop.f32.mrf.mxu0
      %v296 = vadd.f32 %v213, %v295
      %297 = vmatprep.mubr.f32.mxu0 0.0
      %298 = vmatmul.mubr.f32.gmra.mxu0 %v225
      %v299 = vpop.f32.mrf.mxu0
      %v300 = vadd.f32 %v218, %v299
      %v301 = vpop.f32.mrf.mxu0
      %v302 = vadd.f32 %v218, %v301
      %303 = vdwg.mxu0
      %v304 = vmax.f32 %v294, 0.0
      %v305 = vmax.f32 %v296, 0.0
      %v306 = vmax.f32 %v300, 0.0
      %v307 = vmax.f32 %v302, 0.0
      %v308 = vld [vmem:[%s3] sm:$0xff]
      %v309 = vld [vmem:[%s3 + $0x8] sm:$0xff]
      %v310 = vld [vmem:[%s3 + $0x10] sm:$0xff]
      %v311 = vld [vmem:[%s3 + $0x18] sm:$0xff]
      %v312 = vld [vmem:[%s3 + $0x20] sm:$0xff]
      %v313 = vld [vmem:[%s3 + $0x28] sm:$0xff]
      %v314 = vld [vmem:[%s3 + $0x30] sm:$0xff]
      %v315 = vld [vmem:[%s3 + $0x38] sm:$0xff]
      %v316 = vld [vmem:[%s3 + $0x40] sm:$0xff]
      %v317 = vld [vmem:[%s3 + $0x48] sm:$0xff]
      %v318 = vld [vmem:[%s3 + $0x50] sm:$0xff]
      %v319 = vld [vmem:[%s3 + $0x58] sm:$0xff]
      %v320 = vld [vmem:[%s3 + $0x60] sm:$0xff]
      %v321 = vld [vmem:[%s3 + $0x68] sm:$0xff]
      %v322 = vld [vmem:[%s3 + $0x70] sm:$0xff]
      %v323 = vld [vmem:[%s3 + $0x78] sm:$0xff]
      %v324 = vld [vmem:[%s3 + $0x80] sm:$0xff]
      %v325 = vld [vmem:[%s3 + $0x88] sm:$0xff]
      %v326 = vld [vmem:[%s3 + $0x90] sm:$0xff]
      %v327 = vld [vmem:[%s3 + $0x98] sm:$0xff]
      %v328 = vld [vmem:[%s3 + $0xa0] sm:$0xff]
      %v329 = vld [vmem:[%s3 + $0xa8] sm:$0xff]
      %v330 = vld [vmem:[%s3 + $0xb0] sm:$0xff]
      %v331 = vld [vmem:[%s3 + $0xb8] sm:$0xff]
      %v332 = vld [vmem:[%s3 + $0xc0] sm:$0xff]
      %v333 = vld [vmem:[%s3 + $0xc8] sm:$0xff]
      %v334 = vld [vmem:[%s3 + $0xd0] sm:$0xff]
      %v335 = vld [vmem:[%s3 + $0xd8] sm:$0xff]
      %v336 = vld [vmem:[%s3 + $0xe0] sm:$0xff]
      %v337 = vld [vmem:[%s3 + $0xe8] sm:$0xff]
      %v338 = vld [vmem:[%s3 + $0xf0] sm:$0xff]
      %v339 = vld [vmem:[%s3 + $0xf8] sm:$0xff]
      %340 = vmatprep.subr.mxu0 0.0
      %341 = vmatpush1.msra.mxu0 %v323
      %342 = vmatprep.subr.mxu0 0.0
      %343 = vmatpush1.msra.mxu0 %v322
      %344 = vmatprep.subr.mxu0 0.0
      %345 = vmatpush1.msra.mxu0 %v321
      %346 = vmatprep.subr.mxu0 0.0
      %347 = vmatpush1.msra.mxu0 %v320
      %348 = vmatprep.subr.mxu0 0.0
      %349 = vmatpush1.msra.mxu0 %v319
      %350 = vmatprep.subr.mxu0 0.0
      %351 = vmatpush1.msra.mxu0 %v318
      %352 = vmatprep.subr.mxu0 0.0
      %353 = vmatpush1.msra.mxu0 %v317
      %354 = vmatprep.subr.mxu0 0.0
      %355 = vmatpush1.msra.mxu0 %v316
      %356 = vmatprep.subr.mxu0 0.0
      %357 = vmatpush1.msra.mxu0 %v315
      %358 = vmatprep.subr.mxu0 0.0
      %359 = vmatpush1.msra.mxu0 %v314
      %360 = vmatprep.subr.mxu0 0.0
      %361 = vmatpush1.msra.mxu0 %v313
      %362 = vmatprep.subr.mxu0 0.0
      %363 = vmatpush1.msra.mxu0 %v312
      %364 = vmatprep.subr.mxu0 0.0
      %365 = vmatpush1.msra.mxu0 %v311
      %366 = vmatprep.subr.mxu0 0.0
      %367 = vmatpush1.msra.mxu0 %v310
      %368 = vmatprep.subr.mxu0 0.0
      %369 = vmatpush1.msra.mxu0 %v309
      %370 = vmatprep.subr.mxu0 0.0
      %371 = vmatpush1.msra.mxu0 %v308
      %372 = vmatprep.subr.mxu0 0.0
      %373 = vmatpush2.msra.mxu0 %v339
      %374 = vmatprep.subr.mxu0 0.0
      %375 = vmatpush2.msra.mxu0 %v338
      %376 = vmatprep.subr.mxu0 0.0
      %377 = vmatpush2.msra.mxu0 %v337
      %378 = vmatprep.subr.mxu0 0.0
      %379 = vmatpush2.msra.mxu0 %v336
      %380 = vmatprep.subr.mxu0 0.0
      %381 = vmatpush2.msra.mxu0 %v335
      %382 = vmatprep.subr.mxu0 0.0
      %383 = vmatpush2.msra.mxu0 %v334
      %384 = vmatprep.subr.mxu0 0.0
      %385 = vmatpush2.msra.mxu0 %v333
      %386 = vmatprep.subr.mxu0 0.0
      %387 = vmatpush2.msra.mxu0 %v332
      %388 = vmatprep.subr.mxu0 0.0
      %389 = vmatpush2.msra.mxu0 %v331
      %390 = vmatprep.subr.mxu0 0.0
      %391 = vmatpush2.msra.mxu0 %v330
      %392 = vmatprep.subr.mxu0 0.0
      %393 = vmatpush2.msra.mxu0 %v329
      %394 = vmatprep.subr.mxu0 0.0
      %395 = vmatpush2.msra.mxu0 %v328
      %396 = vmatprep.subr.mxu0 0.0
      %397 = vmatpush2.msra.mxu0 %v327
      %398 = vmatprep.subr.mxu0 0.0
      %399 = vmatpush2.msra.mxu0 %v326
      %400 = vmatprep.subr.mxu0 0.0
      %401 = vmatpush2.msra.mxu0 %v325
      %402 = vmatprep.subr.mxu0 0.0
      %403 = vmatpush2.msra.mxu0 %v324
      %404 = vmatprep.mubr.f32.mxu0 %v305
      %405 = vmatmul.mubr.f32.gmra.mxu0 %v304
      %v406 = vpop.f32.mrf.mxu0
      %v407 = vadd.f32 0.0, %v406
      %v408 = vpop.f32.mrf.mxu0
      %409 = vmatprep.mubr.f32.mxu0 %v307
      %410 = vmatmul.mubr.f32.gmra.mxu0 %v306
      %v411 = vpop.f32.mrf.mxu0
      %v412 = vadd.f32 0.0, %v411
      %v413 = vpop.f32.mrf.mxu0
      %414 = vdwg.mxu0
      %vm415 = vcmask 523264
      %416 = vst.msk [vmem:[%s197] sm:$0xff] %vm415, %v407
      %417 = vst.msk [vmem:[%s197 + $0x8] sm:$0xff] %vm415, %v412
      %p418 = scmp.lt.s32.totalorder %s15, 1
      %s419 = scalar_select %p418, %s15, 1
      %s420 = smul.addr %s419, 2
      %s421 = smul.addr %s420, 8
      %s422 = scalar_lea.vmem %s4, %s421
      // Predicated region
      $region37: #{transition_pallas.1} parent=35 // pred_check
        %p423 = pneg %p122
      $region38: #{transition_pallas.1} parent=35 // pred_check_branch
        %425 = sbr.rel (%p423) target = $region40
      $region39: #{transition_pallas.1} parent=35 // pred_region
        _
      $region40: #{transition_pallas.1} parent=35 // pred_fallthru
        _
    $region36: #{transition_pallas.1} parent=5 // pred_fallthru
      _
    %p426 = scmp.le.s32.totalorder 2, %s10
    // Predicated region
    $region41: #{transition_pallas.1} parent=5 // pred_check
      %p427 = pneg %p426
    $region42: #{transition_pallas.1} parent=5 // pred_check_branch
      %429 = sbr.rel (%p427) target = $region44
    $region43: #{transition_pallas.1} parent=5 // pred_region
      %s430 = ssub.s32 %s10, 2
      // Predicated region
      $region45: #{transition_pallas.1} parent=43 // pred_check
        %p431 = pneg %p128
      $region46: #{transition_pallas.1} parent=43 // pred_check_branch
        %433 = sbr.rel (%p431) target = $region48
      $region47: #{transition_pallas.1} parent=43 // pred_region
        %p434 = scmp.lt.s32.totalorder %s16, 1
        %s435 = scalar_select %p434, %s16, 1
        %s436 = smul.addr %s435, 2
        %s437 = smul.addr %s436, 8
        %s438 = scalar_lea.vmem %s4, %s437
      $region48: #{transition_pallas.1} parent=43 // pred_fallthru
        _
    $region44: #{transition_pallas.1} parent=5 // pred_fallthru
      _
  $region6: #{transition_pallas.1} parent=0 // loop_footer
    %s14 = sadd.s32 1, %s10
  $region7: #{transition_pallas.1} parent=0 // loop_footer_branch
    %9 = sbr.rel target = $region3
  $region8: #{transition_pallas.1} parent=0 // loop_exit
    _

</llo_original>
